<compile_context>
chip_gen: v5e
topology: v5e:2x2
jax: 0.10.0
libtpu: 0.0.40
codegen_flags: <defaults>
</compile_context>

<pallas_src>
import jax
import jax.numpy as jnp
from jax.experimental import pallas as pl
from jax.experimental.pallas import tpu as pltpu


def _itemsize(dt):
    return jnp.dtype(dt).itemsize


def _transition_kernel(x_ref, scale_ref, bias_ref, w_ref, p_ref, o_ref):
    # x_ref     : (1, C, T)       raw NCHW tile: C on sublanes, H*W pixels on lanes
    # scale_ref : (C, 1)          gamma / sqrt(var + eps)        (VPU dtype)
    # bias_ref  : (C, 1)          beta - mean * scale            (VPU dtype)
    # w_ref     : (Cout, C)       1x1 conv weight                (MXU dtype)
    # p_ref     : (T, T // 4)     2x2 avg-pool matrix, entries 0.25 (MXU dtype)
    # o_ref     : (1, Cout, T//4) pooled output tile (already NCHW-ordered)
    x = x_ref[0]                                     # (C, T)
    s = scale_ref[...]
    b = bias_ref[...]

    # BatchNorm (inference running stats) + ReLU on the VPU.
    y = jnp.maximum(x.astype(s.dtype) * s + b, 0.0)  # (C, T)

    # 1x1 conv: single MXU matmul, f32 accumulation.
    z = jnp.dot(w_ref[...], y.astype(w_ref.dtype),
                preferred_element_type=jnp.float32)  # (Cout, T) f32

    # 2x2 average pool + compaction as a second MXU matmul.  The 0.25 pooling
    # factor is already folded into P, so no extra VPU multiply is needed.
    o_ref[0] = jnp.dot(z.astype(p_ref.dtype), p_ref[...],
                       preferred_element_type=jnp.float32).astype(o_ref.dtype)


def _pick_spatial_tile(S, W, C, Cout, x_bytes, mm_bytes, out_bytes,
                       budget_bytes, prefer_split):
    """Pick the lane (spatial) tile T.

    T must divide S, be a multiple of 2*W (tiles hold whole 2x2 pool row
    pairs), and be either a multiple of 512 (so T/4 stays lane-dense, a
    multiple of 128) or equal to S.  Prefer the largest T under the VMEM
    budget; if prefer_split (single-sample batch on v7x), prefer T < S so the
    grid has at least two parallel steps.
    """
    def vmem_need(t):
        t4 = t // 4
        return (2 * C * t * x_bytes            # x tile, double-buffered
                + 2 * Cout * t4 * out_bytes    # output tile, double-buffered
                + 2 * t * t4 * mm_bytes        # pooling matrix P
                + 2 * Cout * C * mm_bytes      # conv weight
                + 4 * C * 4)                   # scale + bias

    cands = [t for t in range(2 * W, S + 1, 2 * W)
             if S % t == 0 and (t % 512 == 0 or t == S)]
    fitting = [t for t in cands if vmem_need(t) <= budget_bytes]
    if prefer_split:
        split = [t for t in fitting if t < S]
        if split:
            t = max(split)
            return t, vmem_need(t)
    t = max(fitting) if fitting else min(cands)
    return t, vmem_need(t)


def transition_forward(x_nchw, gamma, beta, running_mean, running_var, conv_w,
                       eps=1e-5, compute_dtype=jnp.bfloat16, vpu_dtype=None,
                       out_dtype=None, vmem_budget_bytes=40 * 1024 * 1024):
    """Transition forward: avg_pool2d(conv1x1(relu(bn(x))), 2), BN in eval mode.

    x_nchw: (N, C, H, W) -> (N, Cout, H//2, W//2), consumed and produced
    directly in NCHW layout (no wrapper transpose/cast passes).

    compute_dtype: MXU operand / output dtype (bf16 for production, f32 exact).
    vpu_dtype    : BN/ReLU element-math dtype; defaults to compute_dtype
                   (bf16 — right for v6e/v7x).  Pass jnp.float32 on v5e,
                   which has no bf16 VALU.
    out_dtype    : kernel output dtype; defaults to compute_dtype.
    """
    N, C, H, W = x_nchw.shape
    assert H % 2 == 0 and W % 2 == 0, "avg_pool2d(2) requires even H and W"
    Cout = conv_w.shape[0]
    Hp, Wp = H // 2, W // 2
    S, Sp = H * W, Hp * Wp

    if vpu_dtype is None:
        vpu_dtype = compute_dtype
    if out_dtype is None:
        out_dtype = compute_dtype

    # Spatial (lane) tile from a VMEM budget (kept safe for v7x's 64 MiB/TC).
    T, vmem_need = _pick_spatial_tile(
        S, W, C, Cout,
        x_bytes=_itemsize(x_nchw.dtype), mm_bytes=_itemsize(compute_dtype),
        out_bytes=_itemsize(out_dtype), budget_bytes=vmem_budget_bytes,
        prefer_split=(N == 1))
    T4 = T // 4
    vmem_limit = int(min(max(vmem_need + (4 << 20), 32 << 20), 128 << 20))

    # Fold BatchNorm (inference mode) into per-channel scale / bias (f32 fold,
    # single rounding into the VPU dtype).
    inv_std = gamma.astype(jnp.float32) / jnp.sqrt(
        running_var.astype(jnp.float32) + eps)
    scale = inv_std.reshape(C, 1).astype(vpu_dtype)
    bias = (beta.astype(jnp.float32)
            - running_mean.astype(jnp.float32) * inv_std
            ).reshape(C, 1).astype(vpu_dtype)

    # 1x1 conv weight (Cout, C, 1, 1) -> (Cout, C); Cout lives on sublanes so
    # no 128-lane padding is needed.
    w2 = conv_w.reshape(Cout, C).astype(compute_dtype)

    # Static 2x2 average-pool matrix for one spatial tile (same for every tile
    # because T is a multiple of 2*W):  P[s, j] = 0.25 iff pixel s=(h, w) of
    # the tile falls into pooled cell j = (h//2)*Wp + (w//2).
    s_idx = jnp.arange(T, dtype=jnp.int32)
    j_idx = (s_idx // W) // 2 * Wp + (s_idx % W) // 2
    pool_mat = jnp.where(
        j_idx[:, None] == jnp.arange(T4, dtype=jnp.int32)[None, :],
        0.25, 0.0).astype(compute_dtype)

    # Free reshape: NCHW already has C on sublanes and spatial on lanes.
    x3 = x_nchw.reshape(N, C, S)

    grid = (N, S // T)
    out3 = pl.pallas_call(
        _transition_kernel,
        out_shape=jax.ShapeDtypeStruct((N, Cout, Sp), out_dtype),
        grid_spec=pltpu.PrefetchScalarGridSpec(
            num_scalar_prefetch=0,
            grid=grid,
            in_specs=[
                pl.BlockSpec((1, C, T), lambda n, si: (n, 0, si)),
                pl.BlockSpec((C, 1), lambda n, si: (0, 0)),
                pl.BlockSpec((C, 1), lambda n, si: (0, 0)),
                pl.BlockSpec((Cout, C), lambda n, si: (0, 0)),
                pl.BlockSpec((T, T4), lambda n, si: (0, 0)),
            ],
            out_specs=pl.BlockSpec((1, Cout, T4), lambda n, si: (n, 0, si)),
        ),
        compiler_params=pltpu.CompilerParams(
            dimension_semantics=("parallel", "parallel"),
            vmem_limit_bytes=vmem_limit,
        ),
    )(x3, scale, bias, w2, pool_mat)

    # Free reshape to the PyTorch NCHW output convention.
    return out3.reshape(N, Cout, Hp, Wp)


def transition_reference(x_nchw, gamma, beta, running_mean, running_var,
                         conv_w, eps=1e-5):
    """Pure-JAX reference mirroring the PyTorch forward (BN in eval mode)."""
    xn = (x_nchw - running_mean[None, :, None, None]) \
        / jnp.sqrt(running_var + eps)[None, :, None, None]
    xn = xn * gamma[None, :, None, None] + beta[None, :, None, None]
    y = jnp.maximum(xn, 0.0)
    w2d = conv_w.reshape(conv_w.shape[0], conv_w.shape[1])
    z = jnp.einsum('nchw,oc->nohw', y, w2d)
    N, O, H, W = z.shape
    return z.reshape(N, O, H // 2, 2, W // 2, 2).mean(axis=(3, 5))


if __name__ == "__main__":
    # Small shapes consistent with Transition(nChannels=4, nOutChannels=2).
    N, C, H, W = 2, 4, 16, 16
    Cout = 2

    key = jax.random.PRNGKey(0)
    kx, kg, kb, km, kv, kw = jax.random.split(key, 6)

    x = jax.random.normal(kx, (N, C, H, W), dtype=jnp.float32)
    gamma = jax.random.normal(kg, (C,), dtype=jnp.float32) * 0.5 + 1.0
    beta = jax.random.normal(kb, (C,), dtype=jnp.float32) * 0.1
    running_mean = jax.random.normal(km, (C,), dtype=jnp.float32) * 0.1
    running_var = jnp.abs(jax.random.normal(kv, (C,), dtype=jnp.float32)) + 0.5
    conv_w = jax.random.normal(kw, (Cout, C, 1, 1), dtype=jnp.float32) * 0.1

    ref = transition_reference(x, gamma, beta, running_mean, running_var, conv_w)

    # Exactness path: f32 MXU operands / f32 output, tight tolerance.
    out_f32 = transition_forward(x, gamma, beta, running_mean, running_var,
                                 conv_w, compute_dtype=jnp.float32)
    out_f32 = jax.block_until_ready(out_f32)
    assert out_f32.shape == (N, Cout, H // 2, W // 2), out_f32.shape
    assert jnp.allclose(out_f32, ref, rtol=1e-4, atol=1e-4), \
        float(jnp.max(jnp.abs(out_f32 - ref)))

    # Production path (v6e/v7x defaults): bf16 MXU + bf16 VPU + bf16 output,
    # f32 accumulation inside the kernel.  On v5e pass vpu_dtype=jnp.float32.
    out_bf16 = transition_forward(x, gamma, beta, running_mean, running_var,
                                  conv_w, compute_dtype=jnp.bfloat16)
    out_bf16 = jax.block_until_ready(out_bf16)
    assert out_bf16.shape == (N, Cout, H // 2, W // 2), out_bf16.shape
    assert jnp.allclose(out_bf16.astype(jnp.float32), ref, rtol=3e-2, atol=3e-2), \
        float(jnp.max(jnp.abs(out_bf16.astype(jnp.float32) - ref)))

    # TODO(synk): training-mode BatchNorm (batch statistics + running-stat
    # update) is not implemented; this kernel matches PyTorch eval() semantics.
    print("KERNEL_OK")
</pallas_src>

<mosaic_0001>
module attributes {stable_mosaic.version = 11 : i64} {
  func.func @_transition_kernel(%arg0: i32, %arg1: i32, %arg2: memref<1x4x256xf32, #tpu.memory_space<vmem>>, %arg3: memref<4x1xf32, #tpu.memory_space<vmem>>, %arg4: memref<4x1xf32, #tpu.memory_space<vmem>>, %arg5: memref<2x4xf32, #tpu.memory_space<vmem>>, %arg6: memref<256x64xf32, #tpu.memory_space<vmem>>, %arg7: memref<1x2x64xf32, #tpu.memory_space<vmem>>) attributes {dimension_semantics = [#tpu.dimension_semantics<parallel>, #tpu.dimension_semantics<parallel>], iteration_bounds = array<i64: 2, 1>, scalar_prefetch = 0 : i64, scratch_operands = 0 : i64, tpu.core_type = #tpu.core_type<tc>, window_params = [{transform_indices = @transform_0, window_bounds = array<i64: 1, 4, 256>}, {pipeline_mode = #tpu.pipeline_mode<synchronous>, transform_indices = @transform_1, window_bounds = array<i64: 4, 1>}, {pipeline_mode = #tpu.pipeline_mode<synchronous>, transform_indices = @transform_2, window_bounds = array<i64: 4, 1>}, {pipeline_mode = #tpu.pipeline_mode<synchronous>, transform_indices = @transform_3, window_bounds = array<i64: 2, 4>}, {pipeline_mode = #tpu.pipeline_mode<synchronous>, transform_indices = @transform_4, window_bounds = array<i64: 256, 64>}, {transform_indices = @transform_5, window_bounds = array<i64: 1, 2, 64>}]} {
    %c0 = arith.constant 0 : index
    %c0_0 = arith.constant 0 : index
    %c0_1 = arith.constant 0 : index
    %0 = vector.load %arg2[%c0, %c0_0, %c0_1] : memref<1x4x256xf32, #tpu.memory_space<vmem>>, vector<1x4x256xf32>
    %1 = vector.shape_cast %0 : vector<1x4x256xf32> to vector<4x256xf32>
    %c0_2 = arith.constant 0 : index
    %c0_3 = arith.constant 0 : index
    %2 = vector.load %arg3[%c0_2, %c0_3] : memref<4x1xf32, #tpu.memory_space<vmem>>, vector<4x1xf32>
    %c0_4 = arith.constant 0 : index
    %c0_5 = arith.constant 0 : index
    %3 = vector.load %arg4[%c0_4, %c0_5] : memref<4x1xf32, #tpu.memory_space<vmem>>, vector<4x1xf32>
    %4 = vector.broadcast %2 : vector<4x1xf32> to vector<4x256xf32>
    %5 = arith.mulf %1, %4 : vector<4x256xf32>
    %6 = vector.broadcast %3 : vector<4x1xf32> to vector<4x256xf32>
    %7 = arith.addf %5, %6 : vector<4x256xf32>
    %cst = arith.constant 0.000000e+00 : f32
    %8 = vector.broadcast %cst : f32 to vector<4x256xf32>
    %9 = arith.maximumf %7, %8 : vector<4x256xf32>
    %c0_6 = arith.constant 0 : index
    %c0_7 = arith.constant 0 : index
    %10 = vector.load %arg5[%c0_6, %c0_7] : memref<2x4xf32, #tpu.memory_space<vmem>>, vector<2x4xf32>
    %cst_8 = arith.constant dense<0.000000e+00> : vector<2x256xf32>
    %11 = tpu.matmul %10, %9, %cst_8 {dimension_numbers = #tpu.dot_dimension_numbers<[1], [0], [0], [1], [0, 0, 1, 1], [], []>} : vector<2x4xf32>, vector<4x256xf32>, vector<2x256xf32> -> vector<2x256xf32>
    %c0_9 = arith.constant 0 : index
    %c0_10 = arith.constant 0 : index
    %12 = vector.load %arg6[%c0_9, %c0_10] : memref<256x64xf32, #tpu.memory_space<vmem>>, vector<256x64xf32>
    %cst_11 = arith.constant dense<0.000000e+00> : vector<2x64xf32>
    %13 = tpu.matmul %11, %12, %cst_11 {dimension_numbers = #tpu.dot_dimension_numbers<[1], [0], [0], [1], [0, 0, 1, 1], [], []>} : vector<2x256xf32>, vector<256x64xf32>, vector<2x64xf32> -> vector<2x64xf32>
    %c0_12 = arith.constant 0 : index
    %c0_13 = arith.constant 0 : index
    %c0_14 = arith.constant 0 : index
    %14 = vector.load %arg7[%c0_12, %c0_13, %c0_14] : memref<1x2x64xf32, #tpu.memory_space<vmem>>, vector<1x2x64xf32>
    %15 = vector.shape_cast %14 : vector<1x2x64xf32> to vector<2x64xf32>
    %16 = vector.shape_cast %13 : vector<2x64xf32> to vector<1x2x64xf32>
    tpu.vector_store %arg7[%c0_12, %c0_13, %c0_14], %16 {strides = array<i32>} : memref<1x2x64xf32, #tpu.memory_space<vmem>>, vector<1x2x64xf32>,
    return
  }
  func.func @transform_0(%arg0: i32, %arg1: i32) -> (i32, i32, i32) {
    %c0_i32 = arith.constant 0 : i32
    %c0_i32_0 = arith.constant 0 : i32
    return %arg0, %c0_i32, %arg1 : i32, i32, i32
  }
  func.func @transform_1(%arg0: i32, %arg1: i32) -> (i32, i32) {
    %c0_i32 = arith.constant 0 : i32
    %c0_i32_0 = arith.constant 0 : i32
    %c0_i32_1 = arith.constant 0 : i32
    return %c0_i32, %c0_i32_0 : i32, i32
  }
  func.func @transform_2(%arg0: i32, %arg1: i32) -> (i32, i32) {
    %c0_i32 = arith.constant 0 : i32
    %c0_i32_0 = arith.constant 0 : i32
    %c0_i32_1 = arith.constant 0 : i32
    return %c0_i32, %c0_i32_0 : i32, i32
  }
  func.func @transform_3(%arg0: i32, %arg1: i32) -> (i32, i32) {
    %c0_i32 = arith.constant 0 : i32
    %c0_i32_0 = arith.constant 0 : i32
    %c0_i32_1 = arith.constant 0 : i32
    return %c0_i32, %c0_i32_0 : i32, i32
  }
  func.func @transform_4(%arg0: i32, %arg1: i32) -> (i32, i32) {
    %c0_i32 = arith.constant 0 : i32
    %c0_i32_0 = arith.constant 0 : i32
    %c0_i32_1 = arith.constant 0 : i32
    return %c0_i32, %c0_i32_0 : i32, i32
  }
  func.func @transform_5(%arg0: i32, %arg1: i32) -> (i32, i32, i32) {
    %c0_i32 = arith.constant 0 : i32
    %c0_i32_0 = arith.constant 0 : i32
    return %arg0, %c0_i32, %arg1 : i32, i32, i32
  }
}

</mosaic_0001>

<llo_original>
// kernel: tpu_custom_call.1
$region0: #{tpu_custom_call.1}
  #allocation0 [shape = 'u32[]', space=smem, size = 0x4, offset = 0x4, fixed_abs, tag = 'smem constant byte address 0x4 - core index']
  #allocation1 [shape = 'u32[72,128]{1,0:T(1,128)}', space=vmem, size = 0x9000, scoped, tag = 'internal scratch']
  %s0 = inlined_call_operand.vmem [shape: f32[2,4,256], index: 0, kind: input, shape index: {}]
  %s1 = inlined_call_operand.vmem [shape: f32[4,1], index: 1, kind: input, shape index: {}]
  %s2 = inlined_call_operand.vmem [shape: f32[4,1], index: 2, kind: input, shape index: {}]
  %s3 = inlined_call_operand.vmem [shape: f32[2,4], index: 3, kind: input, shape index: {}]
  %s4 = inlined_call_operand.vmem [shape: f32[256,64], index: 4, kind: input, shape index: {}]
  %s5 = inlined_call_operand.hbm [shape: f32[2,2,64], index: 5, kind: output, shape index: {}]
  %s6 = sld [smem:[#allocation0]]
  $region53: #{tpu_custom_call.1} parent=0
    _
  %s8 = ssub.s32 1, %s6
  %s9 = scalar_select 0, %s8, %s6
  $region1: #{tpu_custom_call.1} parent=0
    #allocation2 [shape = 'u8[2048]{0}', space=vmem, size = 0x800, scoped, tag = 'output window, operand 0']
    #allocation3 [shape = 's32[2]{0}', space=sflag, size = 0x8, scoped, tag = 'scoped memory for tpu_custom_call.1']
    %10 = vsyncpa [#allocation3], 0
    %s11 = scalar_lea.sflag [#allocation3], 1
    %12 = vsyncpa %s11, 0
    loop: start=0, step=1, limit=4
    $region2: #{tpu_custom_call.1} parent=1 // loop_pre_header
      _
    $region3: #{tpu_custom_call.1} parent=1 // loop_header
      %s14 = sphi 0, %s18
      %p15 = scmp.ge.s32.totalorder %s14, 4
      %s21 = sphi 0, %s33
      %s22 = sphi 0, %s29
      %s23 = sphi 0, %s21
      %s24 = sphi 0, %s22
      %s25 = sphi 0, %s23
      %s26 = sphi 0, %s24
      %s38 = sphi 0, %s40
      %s41 = sphi 0, %s38
      %s42 = sphi 0, %s41
      %s58 = sphi 0, %s42
      %s62 = sphi 0, %s62
      %s64 = sphi 0, %s62
      %s65 = sphi 0, %s64
      %s79 = sphi 0, %s65
      %s83 = sphi 0, %s83
      %s85 = sphi 0, %s83
      %s86 = sphi 0, %s85
      %s100 = sphi 0, %s86
      %s104 = sphi 0, %s104
      %s106 = sphi 0, %s104
      %s107 = sphi 0, %s106
      %s121 = sphi 0, %s107
      %s125 = sphi 0, %s125
      %s127 = sphi 0, %s125
      %s128 = sphi 0, %s127
      %s142 = sphi 0, %s128
      %s150 = sphi 0, %s152
      %s153 = sphi 0, %s150
      %s154 = sphi 0, %s153
      %s170 = sphi 0, %s154
    $region4: #{tpu_custom_call.1} parent=1 // loop_header_branch
      %17 = sbr.rel (%p15) target = $region8
    $region5: #{tpu_custom_call.1} parent=1 // loop_body
      %s19 = ssub.s32 %s14, 1
      %s20 = ssub.s32 %s14, 2
      %s27 = sadd.s32 1, %s22
      %p28 = scmp.ge.s32.totalorder %s27, 1
      %s29 = scalar_select %p28, 0, %s27
      %s30 = sadd.s32 1, %s21
      %s31 = scalar_select %p28, %s30, %s21
      %p32 = scmp.ge.s32.totalorder %s31, 2
      %s33 = scalar_select %p32, 0, %s31
      %s34 = ssub.s32 %s21, %s33
      %s35 = ssub.s32 %s22, %s29
      %s36 = sor.u32 %s34, %s35
      %p37 = scmp.eq.s32.totalorder %s36, 0
      %s39 = sadd.s32 %s38, 1
      %s40 = scalar_select %p37, %s38, %s39
      %p43 = pneg %p37
      %p44 = scmp.eq.s32.totalorder %s14, 1
      %p45 = por %p43, %p44
      %p46 = scmp.ne.s32.totalorder %s38, %s41
      %p47 = scmp.eq.s32.totalorder %s14, 0
      %p48 = por %p46, %p47
      %p49 = scmp.ne.s32.totalorder %s38, %s41
      %p50 = scmp.eq.s32.totalorder %s19, 1
      %p51 = por %p49, %p50
      %p52 = scmp.ne.s32.totalorder %s41, %s42
      %p53 = scmp.eq.s32.totalorder %s19, 0
      %p54 = por %p52, %p53
      %p55 = scmp.ne.s32.totalorder %s41, %s42
      %p56 = scmp.eq.s32.totalorder %s20, 1
      %p57 = por %p55, %p56
      %p59 = scmp.ne.s32.totalorder %s42, %s58
      %p60 = scmp.eq.s32.totalorder %s20, 0
      %p61 = por %p59, %p60
      %s63 = sadd.s32 %s62, 1
      %p66 = scmp.eq.s32.totalorder %s14, 1
      %p67 = scmp.ne.s32.totalorder %s62, %s64
      %p68 = scmp.eq.s32.totalorder %s14, 0
      %p69 = por %p67, %p68
      %p70 = scmp.ne.s32.totalorder %s62, %s64
      %p71 = scmp.eq.s32.totalorder %s19, 1
      %p72 = por %p70, %p71
      %p73 = scmp.ne.s32.totalorder %s64, %s65
      %p74 = scmp.eq.s32.totalorder %s19, 0
      %p75 = por %p73, %p74
      %p76 = scmp.ne.s32.totalorder %s64, %s65
      %p77 = scmp.eq.s32.totalorder %s20, 1
      %p78 = por %p76, %p77
      %p80 = scmp.ne.s32.totalorder %s65, %s79
      %p81 = scmp.eq.s32.totalorder %s20, 0
      %p82 = por %p80, %p81
      %s84 = sadd.s32 %s83, 1
      %p87 = scmp.eq.s32.totalorder %s14, 1
      %p88 = scmp.ne.s32.totalorder %s83, %s85
      %p89 = scmp.eq.s32.totalorder %s14, 0
      %p90 = por %p88, %p89
      %p91 = scmp.ne.s32.totalorder %s83, %s85
      %p92 = scmp.eq.s32.totalorder %s19, 1
      %p93 = por %p91, %p92
      %p94 = scmp.ne.s32.totalorder %s85, %s86
      %p95 = scmp.eq.s32.totalorder %s19, 0
      %p96 = por %p94, %p95
      %p97 = scmp.ne.s32.totalorder %s85, %s86
      %p98 = scmp.eq.s32.totalorder %s20, 1
      %p99 = por %p97, %p98
      %p101 = scmp.ne.s32.totalorder %s86, %s100
      %p102 = scmp.eq.s32.totalorder %s20, 0
      %p103 = por %p101, %p102
      %s105 = sadd.s32 %s104, 1
      %p108 = scmp.eq.s32.totalorder %s14, 1
      %p109 = scmp.ne.s32.totalorder %s104, %s106
      %p110 = scmp.eq.s32.totalorder %s14, 0
      %p111 = por %p109, %p110
      %p112 = scmp.ne.s32.totalorder %s104, %s106
      %p113 = scmp.eq.s32.totalorder %s19, 1
      %p114 = por %p112, %p113
      %p115 = scmp.ne.s32.totalorder %s106, %s107
      %p116 = scmp.eq.s32.totalorder %s19, 0
      %p117 = por %p115, %p116
      %p118 = scmp.ne.s32.totalorder %s106, %s107
      %p119 = scmp.eq.s32.totalorder %s20, 1
      %p120 = por %p118, %p119
      %p122 = scmp.ne.s32.totalorder %s107, %s121
      %p123 = scmp.eq.s32.totalorder %s20, 0
      %p124 = por %p122, %p123
      %s126 = sadd.s32 %s125, 1
      %p129 = scmp.eq.s32.totalorder %s14, 1
      %p130 = scmp.ne.s32.totalorder %s125, %s127
      %p131 = scmp.eq.s32.totalorder %s14, 0
      %p132 = por %p130, %p131
      %p133 = scmp.ne.s32.totalorder %s125, %s127
      %p134 = scmp.eq.s32.totalorder %s19, 1
      %p135 = por %p133, %p134
      %p136 = scmp.ne.s32.totalorder %s127, %s128
      %p137 = scmp.eq.s32.totalorder %s19, 0
      %p138 = por %p136, %p137
      %p139 = scmp.ne.s32.totalorder %s127, %s128
      %p140 = scmp.eq.s32.totalorder %s20, 1
      %p141 = por %p139, %p140
      %p143 = scmp.ne.s32.totalorder %s128, %s142
      %p144 = scmp.eq.s32.totalorder %s20, 0
      %p145 = por %p143, %p144
      %s146 = ssub.s32 %s21, %s33
      %s147 = ssub.s32 %s22, %s29
      %s148 = sor.u32 %s146, %s147
      %p149 = scmp.eq.s32.totalorder %s148, 0
      %s151 = sadd.s32 %s150, 1
      %s152 = scalar_select %p149, %s150, %s151
      %p155 = pneg %p149
      %p156 = scmp.eq.s32.totalorder %s14, 1
      %p157 = por %p155, %p156
      %p158 = scmp.ne.s32.totalorder %s150, %s153
      %p159 = scmp.eq.s32.totalorder %s14, 0
      %p160 = por %p158, %p159
      %p161 = scmp.ne.s32.totalorder %s150, %s153
      %p162 = scmp.eq.s32.totalorder %s19, 1
      %p163 = por %p161, %p162
      %p164 = scmp.ne.s32.totalorder %s153, %s154
      %p165 = scmp.eq.s32.totalorder %s19, 0
      %p166 = por %p164, %p165
      %p167 = scmp.ne.s32.totalorder %s153, %s154
      %p168 = scmp.eq.s32.totalorder %s20, 1
      %p169 = por %p167, %p168
      %p171 = scmp.ne.s32.totalorder %s154, %s170
      %p172 = scmp.eq.s32.totalorder %s20, 0
      %p173 = por %p171, %p172
      %p174 = scmp.le.s32.totalorder 1, %s14
      %p175 = scmp.lt.s32.totalorder %s14, 3
      %p176 = pnand %p174, %p175
      %p177 = pneg %p176
      // Predicated region
      $region9: #{tpu_custom_call.1} parent=5 // pred_check
        _
      $region10: #{tpu_custom_call.1} parent=5 // pred_check_branch
        %179 = sbr.rel (%p176) target = $region12
      $region11: #{tpu_custom_call.1} parent=5 // pred_region
        %s180 = ssub.s32 %s14, 1
        // Predicated region
        $region13: #{tpu_custom_call.1} parent=11 // pred_check
          %p181 = pneg %p75
        $region14: #{tpu_custom_call.1} parent=11 // pred_check_branch
          %183 = sbr.rel (%p181) target = $region16
        $region15: #{tpu_custom_call.1} parent=11 // pred_region
          _
        $region16: #{tpu_custom_call.1} parent=11 // pred_fallthru
          _
        // Predicated region
        $region17: #{tpu_custom_call.1} parent=11 // pred_check
          %p184 = pneg %p96
        $region18: #{tpu_custom_call.1} parent=11 // pred_check_branch
          %186 = sbr.rel (%p184) target = $region20
        $region19: #{tpu_custom_call.1} parent=11 // pred_region
          _
        $region20: #{tpu_custom_call.1} parent=11 // pred_fallthru
          _
        // Predicated region
        $region21: #{tpu_custom_call.1} parent=11 // pred_check
          %p187 = pneg %p117
        $region22: #{tpu_custom_call.1} parent=11 // pred_check_branch
          %189 = sbr.rel (%p187) target = $region24
        $region23: #{tpu_custom_call.1} parent=11 // pred_region
          _
        $region24: #{tpu_custom_call.1} parent=11 // pred_fallthru
          _
        // Predicated region
        $region25: #{tpu_custom_call.1} parent=11 // pred_check
          %p190 = pneg %p138
        $region26: #{tpu_custom_call.1} parent=11 // pred_check_branch
          %192 = sbr.rel (%p190) target = $region28
        $region27: #{tpu_custom_call.1} parent=11 // pred_region
          _
        $region28: #{tpu_custom_call.1} parent=11 // pred_fallthru
          _
      $region12: #{tpu_custom_call.1} parent=5 // pred_fallthru
        _
      %p193 = scmp.lt.s32.totalorder %s14, 2
      // Predicated region
      $region29: #{tpu_custom_call.1} parent=5 // pred_check
        %p194 = pneg %p193
      $region30: #{tpu_custom_call.1} parent=5 // pred_check_branch
        %196 = sbr.rel (%p194) target = $region32
      $region31: #{tpu_custom_call.1} parent=5 // pred_region
        // Predicated region
        $region33: #{tpu_custom_call.1} parent=31 // pred_check
          %p197 = pneg %p48
        $region34: #{tpu_custom_call.1} parent=31 // pred_check_branch
          %199 = sbr.rel (%p197) target = $region36
        $region35: #{tpu_custom_call.1} parent=31 // pred_region
          %s200 = smul.u32 2, %s22
          %p201 = scmp.lt.s32.totalorder %s21, 1
          %s202 = scalar_select %p201, %s21, 1
          %p203 = scmp.lt.s32.totalorder %s200, 1
          %s204 = scalar_select %p203, %s200, 1
          %s205 = smul.addr %s202, 2
          %s206 = sadd.s32 %s204, %s205
          %s207 = smul.addr %s206, 4
          %s208 = scalar_lea.vmem %s0, %s207
          %s209 = smul.u32 2, %s22
        $region36: #{tpu_custom_call.1} parent=31 // pred_fallthru
          _
      $region32: #{tpu_custom_call.1} parent=5 // pred_fallthru
        _
      %p210 = scmp.le.s32.totalorder 1, %s14
      %p211 = scmp.lt.s32.totalorder %s14, 3
      %p212 = pnand %p210, %p211
      %p213 = pneg %p212
      // Predicated region
      $region37: #{tpu_custom_call.1} parent=5 // pred_check
        _
      $region38: #{tpu_custom_call.1} parent=5 // pred_check_branch
        %215 = sbr.rel (%p212) target = $region40
      $region39: #{tpu_custom_call.1} parent=5 // pred_region
        %s216 = ssub.s32 %s14, 1
        %s217 = smul.u32 2, %s24
        %p218 = scmp.lt.s32.totalorder %s23, 1
        %s219 = scalar_select %p218, %s23, 1
        %p220 = scmp.lt.s32.totalorder %s217, 1
        %s221 = scalar_select %p220, %s217, 1
        %s222 = smul.addr %s219, 2
        %s223 = sadd.s32 %s221, %s222
        %s224 = smul.addr %s223, 4
        %s225 = scalar_lea.vmem %s0, %s224
        %p226 = pneg %p54
        %p227 = pneg %p51
        %p228 = pneg %p75
        %p229 = pneg %p72
        %p230 = pneg %p96
        %p231 = pneg %p93
        %p232 = pneg %p117
        %p233 = pneg %p114
        %p234 = pneg %p138
        %p235 = pneg %p135
        %p236 = pneg %p166
        %p237 = pneg %p163
        %s238 = sand.u32 %s153, 1
        %s239 = scalar_lea.sflag [#allocation3], %s238
        %s240 = sand.u32 %s153, 1
        %s241 = smul.addr %s240, 2
        %s242 = scalar_lea.vmem [#allocation2], %s241
        %s243 = smul.u32 2, %s24
        %p244 = scmp.lt.s32.totalorder %s23, 1
        %s245 = scalar_select %p244, %s23, 1
        %p246 = scmp.lt.s32.totalorder %s243, 1
        %s247 = scalar_select %p246, %s243, 1
        %s248 = smul.addr %s245, 2
        %s249 = sadd.s32 %s247, %s248
        %s250 = smul.addr %s249, 4
        %s251 = scalar_lea.vmem %s0, %s250
        %s252 = smul.u32 2, %s24
        %v253 = vld [vmem:[%s251] sm:$0xff]
        %v254 = vld [vmem:[%s1] sm:$0xf]
        %v255 = vld [vmem:[%s2] sm:$0xf]
        %257 = vset.pattern.permute.xlu0 0
        %258 = vperm.xlu0 %257, %v254
        %v259 = vpop.permute.xlu0 %258
        %v261 = vunpack.c.l.s4 839922192
        %v262 = vunpack.c.0.s8 %v261
        %v263 = vperm.slane %v259, %v262
        %v265 = vmul.f32 %v253, %v263
        %267 = vset.pattern.permute.xlu0 0
        %268 = vperm.xlu0 %267, %v255
        %v269 = vpop.permute.xlu0 %268
        %v271 = vunpack.c.l.s4 839922192
        %v272 = vunpack.c.0.s8 %v271
        %v273 = vperm.slane %v269, %v272
        %v275 = vadd.f32 %v265, %v273
        %v276 = vmax.f32 %v275, 0.0
        %v277 = vld [vmem:[%s3] sm:$0x3]
        %279 = vst [vmem:[#allocation1] ss:$2 sm:$0xff] %v276
        %v280 = vld.sshfl [vmem:[#allocation1] sm:$0xff pattern:$0x75316420]
        %v281 = vld.sshfl [vmem:[#allocation1 + $0x8] sm:$0xff pattern:$0x75316420]
        %vm282 = vcmask 31744
        %v284 = vsel %vm282, %v277, 0
        %vm286 = vcmask 1043456
        %v287 = vsel %vm286, %v280, 0
        %v289 = vsel %vm286, %v281, 0
        %291 = vmatpush.msra.mxu0 0.0
        %292 = vmatpush.msra.mxu0 0.0
        %293 = vmatpush.msra.mxu0 0.0
        %294 = vmatpush.msra.mxu0 0.0
        %295 = vmatpush.msra.mxu0 0.0
        %296 = vmatpush.msra.mxu0 0.0
        %297 = vmatpush.msra.mxu0 0.0
        %298 = vmatpush.msra.mxu0 0.0
        %299 = vmatpush.msra.mxu0 0.0
        %300 = vmatpush.msra.mxu0 0.0
        %301 = vmatpush.msra.mxu0 0.0
        %302 = vmatpush.msra.mxu0 0.0
        %303 = vmatpush.msra.mxu0 0.0
        %304 = vmatpush.msra.mxu0 0.0
        %305 = vmatpush.msra.mxu0 0.0
        %306 = vmatpush.msra.mxu0 %v287
        %307 = vmatmul.f32.gmra.mxu0 %v284
        %v308 = vpop.f32.mrf.mxu0
        %v309 = vadd.f32 0.0, %v308
        %310 = vdwg.mxu0
        %311 = vmatpush.msra.mxu0 0.0
        %312 = vmatpush.msra.mxu0 0.0
        %313 = vmatpush.msra.mxu0 0.0
        %314 = vmatpush.msra.mxu0 0.0
        %315 = vmatpush.msra.mxu0 0.0
        %316 = vmatpush.msra.mxu0 0.0
        %317 = vmatpush.msra.mxu0 0.0
        %318 = vmatpush.msra.mxu0 0.0
        %319 = vmatpush.msra.mxu0 0.0
        %320 = vmatpush.msra.mxu0 0.0
        %321 = vmatpush.msra.mxu0 0.0
        %322 = vmatpush.msra.mxu0 0.0
        %323 = vmatpush.msra.mxu0 0.0
        %324 = vmatpush.msra.mxu0 0.0
        %325 = vmatpush.msra.mxu0 0.0
        %326 = vmatpush.msra.mxu0 %v289
        %327 = vmatmul.f32.gmra.mxu0 %v284
        %v328 = vpop.f32.mrf.mxu0
        %v329 = vadd.f32 0.0, %v328
        %330 = vdwg.mxu0
        %v331 = vld [vmem:[%s4] sm:$0xff]
        %v332 = vld [vmem:[%s4 + $0x8] sm:$0xff]
        %v333 = vld [vmem:[%s4 + $0x10] sm:$0xff]
        %v334 = vld [vmem:[%s4 + $0x18] sm:$0xff]
        %v335 = vld [vmem:[%s4 + $0x20] sm:$0xff]
        %v336 = vld [vmem:[%s4 + $0x28] sm:$0xff]
        %v337 = vld [vmem:[%s4 + $0x30] sm:$0xff]
        %v338 = vld [vmem:[%s4 + $0x38] sm:$0xff]
        %v339 = vld [vmem:[%s4 + $0x40] sm:$0xff]
        %v340 = vld [vmem:[%s4 + $0x48] sm:$0xff]
        %v341 = vld [vmem:[%s4 + $0x50] sm:$0xff]
        %v342 = vld [vmem:[%s4 + $0x58] sm:$0xff]
        %v343 = vld [vmem:[%s4 + $0x60] sm:$0xff]
        %v344 = vld [vmem:[%s4 + $0x68] sm:$0xff]
        %v345 = vld [vmem:[%s4 + $0x70] sm:$0xff]
        %v346 = vld [vmem:[%s4 + $0x78] sm:$0xff]
        %v347 = vld [vmem:[%s4 + $0x80] sm:$0xff]
        %v348 = vld [vmem:[%s4 + $0x88] sm:$0xff]
        %v349 = vld [vmem:[%s4 + $0x90] sm:$0xff]
        %v350 = vld [vmem:[%s4 + $0x98] sm:$0xff]
        %v351 = vld [vmem:[%s4 + $0xa0] sm:$0xff]
        %v352 = vld [vmem:[%s4 + $0xa8] sm:$0xff]
        %v353 = vld [vmem:[%s4 + $0xb0] sm:$0xff]
        %v354 = vld [vmem:[%s4 + $0xb8] sm:$0xff]
        %v355 = vld [vmem:[%s4 + $0xc0] sm:$0xff]
        %v356 = vld [vmem:[%s4 + $0xc8] sm:$0xff]
        %v357 = vld [vmem:[%s4 + $0xd0] sm:$0xff]
        %v358 = vld [vmem:[%s4 + $0xd8] sm:$0xff]
        %v359 = vld [vmem:[%s4 + $0xe0] sm:$0xff]
        %v360 = vld [vmem:[%s4 + $0xe8] sm:$0xff]
        %v361 = vld [vmem:[%s4 + $0xf0] sm:$0xff]
        %v362 = vld [vmem:[%s4 + $0xf8] sm:$0xff]
        %363 = vmatpush.msra.mxu0 %v346
        %364 = vmatpush.msra.mxu0 %v345
        %365 = vmatpush.msra.mxu0 %v344
        %366 = vmatpush.msra.mxu0 %v343
        %367 = vmatpush.msra.mxu0 %v342
        %368 = vmatpush.msra.mxu0 %v341
        %369 = vmatpush.msra.mxu0 %v340
        %370 = vmatpush.msra.mxu0 %v339
        %371 = vmatpush.msra.mxu0 %v338
        %372 = vmatpush.msra.mxu0 %v337
        %373 = vmatpush.msra.mxu0 %v336
        %374 = vmatpush.msra.mxu0 %v335
        %375 = vmatpush.msra.mxu0 %v334
        %376 = vmatpush.msra.mxu0 %v333
        %377 = vmatpush.msra.mxu0 %v332
        %378 = vmatpush.msra.mxu0 %v331
        %379 = vmatmul.f32.gmra.mxu0 %v309
        %v380 = vpop.f32.mrf.mxu0
        %v381 = vadd.f32 0.0, %v380
        %382 = vdwg.mxu0
        %383 = vmatpush.msra.mxu0 %v362
        %384 = vmatpush.msra.mxu0 %v361
        %385 = vmatpush.msra.mxu0 %v360
        %386 = vmatpush.msra.mxu0 %v359
        %387 = vmatpush.msra.mxu0 %v358
        %388 = vmatpush.msra.mxu0 %v357
        %389 = vmatpush.msra.mxu0 %v356
        %390 = vmatpush.msra.mxu0 %v355
        %391 = vmatpush.msra.mxu0 %v354
        %392 = vmatpush.msra.mxu0 %v353
        %393 = vmatpush.msra.mxu0 %v352
        %394 = vmatpush.msra.mxu0 %v351
        %395 = vmatpush.msra.mxu0 %v350
        %396 = vmatpush.msra.mxu0 %v349
        %397 = vmatpush.msra.mxu0 %v348
        %398 = vmatpush.msra.mxu0 %v347
        %399 = vmatmul.f32.gmra.mxu0 %v329
        %v400 = vpop.f32.mrf.mxu0
        %v401 = vadd.f32 %v381, %v400
        %402 = vdwg.mxu0
        %vm403 = vcmask 517120
        %404 = vst.msk [vmem:[%s242] sm:$0x3] %vm403, %v401
        %s405 = sand.u32 %s153, 1
        %s406 = scalar_lea.sflag [#allocation3], %s405
        %s407 = sand.u32 %s153, 1
        %s408 = smul.addr %s407, 2
        %s409 = scalar_lea.vmem [#allocation2], %s408
        // Predicated region
        $region41: #{tpu_custom_call.1} parent=39 // pred_check
          %p410 = pneg %p163
        $region42: #{tpu_custom_call.1} parent=39 // pred_check_branch
          %412 = sbr.rel (%p410) target = $region44
        $region43: #{tpu_custom_call.1} parent=39 // pred_region
          %414 = vsyncadd %s406, 0
          %s415 = sadd.s32 %s24, %s23
          %s416 = smul.addr %s415, 2
          %s417 = scalar_lea.hbm %s5, %s416
          %s419 = sshll.u32 %s409, 4
          %s420 = int_to_ptr.vmem [resolvable:$true] %s419
          %s421 = sshll.u32 %s417, 4
          %s422 = int_to_ptr.hbm [resolvable:$true] %s421
          %424 = dma.vmem_to_hbm [thread:$0]  %s420, 32, %s422, %s406
        $region44: #{tpu_custom_call.1} parent=39 // pred_fallthru
          _
      $region40: #{tpu_custom_call.1} parent=5 // pred_fallthru
        _
      %p425 = scmp.le.s32.totalorder 2, %s14
      // Predicated region
      $region45: #{tpu_custom_call.1} parent=5 // pred_check
        %p426 = pneg %p425
      $region46: #{tpu_custom_call.1} parent=5 // pred_check_branch
        %428 = sbr.rel (%p426) target = $region48
      $region47: #{tpu_custom_call.1} parent=5 // pred_region
        %s429 = ssub.s32 %s14, 2
        // Predicated region
        $region49: #{tpu_custom_call.1} parent=47 // pred_check
          %p430 = pneg %p169
        $region50: #{tpu_custom_call.1} parent=47 // pred_check_branch
          %432 = sbr.rel (%p430) target = $region52
        $region51: #{tpu_custom_call.1} parent=47 // pred_region
          %s433 = sand.u32 %s154, 1
          %s434 = scalar_lea.sflag [#allocation3], %s433
          %s435 = sand.u32 %s154, 1
          %s436 = smul.addr %s435, 2
          %s437 = scalar_lea.vmem [#allocation2], %s436
          %439 = dma.done %s434, 32
        $region52: #{tpu_custom_call.1} parent=47 // pred_fallthru
          _
      $region48: #{tpu_custom_call.1} parent=5 // pred_fallthru
        _
    $region6: #{tpu_custom_call.1} parent=1 // loop_footer
      %s18 = sadd.s32 1, %s14
    $region7: #{tpu_custom_call.1} parent=1 // loop_footer_branch
      %13 = sbr.rel target = $region3
    $region8: #{tpu_custom_call.1} parent=1 // loop_exit
      _
    %440 = vsyncpa [#allocation3], 1
    %s441 = scalar_lea.sflag [#allocation3], 1
    %442 = vsyncpa %s441, 1

</llo_original>
